<compile_context>
chip_gen: v5e
topology: v5e:2x2
jax: 0.10.0
libtpu: 0.0.40
codegen_flags: <defaults>
</compile_context>

<pallas_src>
import functools

import jax
import jax.numpy as jnp
from jax.experimental import pallas as pl
from jax.experimental.pallas import tpu as pltpu


# ---------------------------------------------------------------------------
# Fused kernel: SAGEConv + activation + Linear, all VMEM-resident
# ---------------------------------------------------------------------------
def _sage_decoder_kernel(x_ref, agg_ref, wl_ref, wr_ref, b1_ref, w2_ref, b2_ref,
                         out_ref, *, activation):
    x = x_ref[...]                                            # (N, F)
    # mean of in-neighbor features: one MXU matmul against the precomputed
    # row-normalized adjacency (replaces the sparse scatter-mean).
    xm = jnp.dot(agg_ref[...], x, preferred_element_type=jnp.float32)   # (N, F)

    # SAGEConv: lin_l(neighbor mean) + lin_r(root) + bias  (two MXU matmuls)
    h = (jnp.dot(xm, wl_ref[...], preferred_element_type=jnp.float32)
         + jnp.dot(x, wr_ref[...], preferred_element_type=jnp.float32)
         + b1_ref[...])                                       # (N, H)

    if activation == "relu":
        h = jnp.maximum(h, 0.0)
    else:  # 'elu' (alpha=1)
        h = jnp.where(h > 0.0, h, jnp.exp(h) - 1.0)

    # Linear1
    out_ref[...] = (jnp.dot(h, w2_ref[...], preferred_element_type=jnp.float32)
                    + b2_ref[...])


# ---------------------------------------------------------------------------
# Wrapper
# ---------------------------------------------------------------------------
def graph_decoder_forward(params, x, agg, *, activation="relu"):
    n = x.shape[0]
    out_ch = params["w2"].shape[1]
    kern = functools.partial(_sage_decoder_kernel, activation=activation)
    vmem = pl.BlockSpec(memory_space=pltpu.MemorySpace.VMEM)
    return pl.pallas_call(
        kern,
        out_shape=jax.ShapeDtypeStruct((n, out_ch), jnp.float32),
        in_specs=[vmem] * 7,
        out_specs=vmem,
    )(x, agg, params["w_l"], params["w_r"], params["b1"], params["w2"], params["b2"])


def build_mean_agg(edge_index, n):
    """Dense row-normalized aggregation matrix for SAGEConv mean aggregation.

    agg[i, j] = (# edges j->i) / deg_in(i), so (agg @ x)[i] is the mean of the
    messages x[j] flowing into node i. Computed ONCE per graph outside the kernel
    (keeps the scatter off the hot path, per the perf review).
    """
    src, dst = edge_index[0], edge_index[1]
    adj = jnp.zeros((n, n), jnp.float32).at[dst, src].add(1.0)
    deg = jnp.clip(jnp.sum(adj, axis=1, keepdims=True), 1.0, None)
    return adj / deg


# ---------------------------------------------------------------------------
# Deterministic parameters
# ---------------------------------------------------------------------------
def _glorot(key, shape):
    limit = (6.0 / (shape[0] + shape[1])) ** 0.5
    return jax.random.uniform(key, shape, jnp.float32, -limit, limit)


def make_params(key, in_ch, hidden_ch, out_ch):
    ks = jax.random.split(key, 3)
    return {
        "w_l": _glorot(ks[0], (in_ch, hidden_ch)),   # SAGEConv lin_l (neighbors, bias below)
        "w_r": _glorot(ks[1], (in_ch, hidden_ch)),   # SAGEConv lin_r (root, no bias)
        "b1": jnp.zeros((1, hidden_ch), jnp.float32),
        "w2": _glorot(ks[2], (hidden_ch, out_ch)),   # Linear1
        "b2": jnp.zeros((1, out_ch), jnp.float32),
    }


# ---------------------------------------------------------------------------
# Pure-JAX reference (for correctness check)
# ---------------------------------------------------------------------------
def _ref_forward(params, x, agg, activation="relu"):
    xm = agg @ x
    h = xm @ params["w_l"] + x @ params["w_r"] + params["b1"]
    h = jnp.maximum(h, 0.0) if activation == "relu" else jnp.where(h > 0, h, jnp.exp(h) - 1.0)
    return h @ params["w2"] + params["b2"]


# ---------------------------------------------------------------------------
if __name__ == "__main__":
    N = 32            # nodes
    IN_CH = 16
    HID_CH = 32
    OUT_CH = 16

    key = jax.random.PRNGKey(0)
    k_par, k_x = jax.random.split(key, 2)

    params = make_params(k_par, IN_CH, HID_CH, OUT_CH)
    x = jax.random.normal(k_x, (N, IN_CH), jnp.float32)

    # deterministic small graph: bidirectional ring over N nodes
    src = jnp.arange(N, dtype=jnp.int32)
    dst = (src + 1) % N
    edge_index = jnp.stack([jnp.concatenate([src, dst]),
                            jnp.concatenate([dst, src])])     # (2, 2N)

    # precompute the dense mean-aggregation matrix once (static per graph)
    agg = build_mean_agg(edge_index, N)

    fwd = jax.jit(functools.partial(graph_decoder_forward, activation="relu"))
    out = fwd(params, x, agg)
    jax.block_until_ready(out)

    ref = _ref_forward(params, x, agg, activation="relu")
    assert out.shape == (N, OUT_CH)
    assert jnp.allclose(out, ref, rtol=1e-5, atol=1e-5), "mismatch vs reference"
    print("KERNEL_OK")
</pallas_src>

<mosaic_0001>
module attributes {stable_mosaic.version = 11 : i64} {
  func.func @_sage_decoder_kernel(%arg0: memref<32x16xf32, #tpu.memory_space<vmem>>, %arg1: memref<32x32xf32, #tpu.memory_space<vmem>>, %arg2: memref<16x32xf32, #tpu.memory_space<vmem>>, %arg3: memref<16x32xf32, #tpu.memory_space<vmem>>, %arg4: memref<1x32xf32, #tpu.memory_space<vmem>>, %arg5: memref<32x16xf32, #tpu.memory_space<vmem>>, %arg6: memref<1x16xf32, #tpu.memory_space<vmem>>, %arg7: memref<32x16xf32, #tpu.memory_space<vmem>>) attributes {dimension_semantics = [], scalar_prefetch = 0 : i64, scratch_operands = 0 : i64, tpu.core_type = #tpu.core_type<tc>} {
    %c0 = arith.constant 0 : index
    %c0_0 = arith.constant 0 : index
    %0 = vector.load %arg0[%c0, %c0_0] : memref<32x16xf32, #tpu.memory_space<vmem>>, vector<32x16xf32>
    %c0_1 = arith.constant 0 : index
    %c0_2 = arith.constant 0 : index
    %1 = vector.load %arg1[%c0_1, %c0_2] : memref<32x32xf32, #tpu.memory_space<vmem>>, vector<32x32xf32>
    %cst = arith.constant dense<0.000000e+00> : vector<32x16xf32>
    %2 = tpu.matmul %1, %0, %cst {dimension_numbers = #tpu.dot_dimension_numbers<[1], [0], [0], [1], [0, 0, 1, 1], [], []>} : vector<32x32xf32>, vector<32x16xf32>, vector<32x16xf32> -> vector<32x16xf32>
    %c0_3 = arith.constant 0 : index
    %c0_4 = arith.constant 0 : index
    %3 = vector.load %arg2[%c0_3, %c0_4] : memref<16x32xf32, #tpu.memory_space<vmem>>, vector<16x32xf32>
    %cst_5 = arith.constant dense<0.000000e+00> : vector<32x32xf32>
    %4 = tpu.matmul %2, %3, %cst_5 {dimension_numbers = #tpu.dot_dimension_numbers<[1], [0], [0], [1], [0, 0, 1, 1], [], []>} : vector<32x16xf32>, vector<16x32xf32>, vector<32x32xf32> -> vector<32x32xf32>
    %c0_6 = arith.constant 0 : index
    %c0_7 = arith.constant 0 : index
    %5 = vector.load %arg3[%c0_6, %c0_7] : memref<16x32xf32, #tpu.memory_space<vmem>>, vector<16x32xf32>
    %cst_8 = arith.constant dense<0.000000e+00> : vector<32x32xf32>
    %6 = tpu.matmul %0, %5, %cst_8 {dimension_numbers = #tpu.dot_dimension_numbers<[1], [0], [0], [1], [0, 0, 1, 1], [], []>} : vector<32x16xf32>, vector<16x32xf32>, vector<32x32xf32> -> vector<32x32xf32>
    %7 = arith.addf %4, %6 : vector<32x32xf32>
    %c0_9 = arith.constant 0 : index
    %c0_10 = arith.constant 0 : index
    %8 = vector.load %arg4[%c0_9, %c0_10] : memref<1x32xf32, #tpu.memory_space<vmem>>, vector<1x32xf32>
    %9 = vector.broadcast %8 : vector<1x32xf32> to vector<32x32xf32>
    %10 = arith.addf %7, %9 : vector<32x32xf32>
    %cst_11 = arith.constant 0.000000e+00 : f32
    %11 = vector.broadcast %cst_11 : f32 to vector<32x32xf32>
    %12 = arith.maximumf %10, %11 : vector<32x32xf32>
    %c0_12 = arith.constant 0 : index
    %c0_13 = arith.constant 0 : index
    %13 = vector.load %arg5[%c0_12, %c0_13] : memref<32x16xf32, #tpu.memory_space<vmem>>, vector<32x16xf32>
    %cst_14 = arith.constant dense<0.000000e+00> : vector<32x16xf32>
    %14 = tpu.matmul %12, %13, %cst_14 {dimension_numbers = #tpu.dot_dimension_numbers<[1], [0], [0], [1], [0, 0, 1, 1], [], []>} : vector<32x32xf32>, vector<32x16xf32>, vector<32x16xf32> -> vector<32x16xf32>
    %c0_15 = arith.constant 0 : index
    %c0_16 = arith.constant 0 : index
    %15 = vector.load %arg6[%c0_15, %c0_16] : memref<1x16xf32, #tpu.memory_space<vmem>>, vector<1x16xf32>
    %16 = vector.broadcast %15 : vector<1x16xf32> to vector<32x16xf32>
    %17 = arith.addf %14, %16 : vector<32x16xf32>
    %c0_17 = arith.constant 0 : index
    %c0_18 = arith.constant 0 : index
    %18 = vector.load %arg7[%c0_17, %c0_18] : memref<32x16xf32, #tpu.memory_space<vmem>>, vector<32x16xf32>
    tpu.vector_store %arg7[%c0_17, %c0_18], %17 {strides = array<i32>} : memref<32x16xf32, #tpu.memory_space<vmem>>, vector<32x16xf32>,
    return
  }
}

</mosaic_0001>

<llo_original>
// kernel: graph_decoder_forward.1
$region0: #{graph_decoder_forward.1}
  #allocation0 [shape = 'u32[]', space=smem, size = 0x4, offset = 0x4, fixed_abs, tag = 'smem constant byte address 0x4 - core index']
  #allocation1 [shape = 'u32[72,128]{1,0:T(1,128)}', space=vmem, size = 0x9000, scoped, tag = 'internal scratch']
  %s0 = inlined_call_operand.vmem [shape: f32[32,16], index: 0, kind: input, shape index: {}]
  %s1 = inlined_call_operand.vmem [shape: f32[32,32], index: 1, kind: input, shape index: {}]
  %s2 = inlined_call_operand.vmem [shape: f32[16,32], index: 2, kind: input, shape index: {}]
  %s3 = inlined_call_operand.vmem [shape: f32[16,32], index: 3, kind: input, shape index: {}]
  %s4 = inlined_call_operand.vmem [shape: f32[1,32], index: 4, kind: input, shape index: {}]
  %s5 = inlined_call_operand.vmem [shape: f32[32,16], index: 5, kind: input, shape index: {}]
  %s6 = inlined_call_operand.vmem [shape: f32[1,16], index: 6, kind: input, shape index: {}]
  %s7 = inlined_call_operand.vmem [shape: f32[32,16], index: 7, kind: output, shape index: {}]
  %s8 = sld [smem:[#allocation0]]
  $region38: #{graph_decoder_forward.1} parent=0
    _
  %s10 = ssub.s32 1, %s8
  %s11 = scalar_select 0, %s10, %s8
  // Predicated region
  $region2: #{graph_decoder_forward.1} parent=0 // pred_check
    _
  $region3: #{graph_decoder_forward.1} parent=0 // pred_check_branch
    %13 = sbr.rel (0) target = $region5
  $region4: #{graph_decoder_forward.1} parent=0 // pred_region
    _
  $region5: #{graph_decoder_forward.1} parent=0 // pred_fallthru
    _
  // Predicated region
  $region6: #{graph_decoder_forward.1} parent=0 // pred_check
    _
  $region7: #{graph_decoder_forward.1} parent=0 // pred_check_branch
    %15 = sbr.rel (0) target = $region9
  $region8: #{graph_decoder_forward.1} parent=0 // pred_region
    _
  $region9: #{graph_decoder_forward.1} parent=0 // pred_fallthru
    _
  // Predicated region
  $region10: #{graph_decoder_forward.1} parent=0 // pred_check
    _
  $region11: #{graph_decoder_forward.1} parent=0 // pred_check_branch
    %17 = sbr.rel (0) target = $region13
  $region12: #{graph_decoder_forward.1} parent=0 // pred_region
    _
  $region13: #{graph_decoder_forward.1} parent=0 // pred_fallthru
    _
  // Predicated region
  $region14: #{graph_decoder_forward.1} parent=0 // pred_check
    _
  $region15: #{graph_decoder_forward.1} parent=0 // pred_check_branch
    %19 = sbr.rel (0) target = $region17
  $region16: #{graph_decoder_forward.1} parent=0 // pred_region
    _
  $region17: #{graph_decoder_forward.1} parent=0 // pred_fallthru
    _
  // Predicated region
  $region18: #{graph_decoder_forward.1} parent=0 // pred_check
    _
  $region19: #{graph_decoder_forward.1} parent=0 // pred_check_branch
    %21 = sbr.rel (0) target = $region21
  $region20: #{graph_decoder_forward.1} parent=0 // pred_region
    _
  $region21: #{graph_decoder_forward.1} parent=0 // pred_fallthru
    _
  // Predicated region
  $region22: #{graph_decoder_forward.1} parent=0 // pred_check
    _
  $region23: #{graph_decoder_forward.1} parent=0 // pred_check_branch
    %23 = sbr.rel (0) target = $region25
  $region24: #{graph_decoder_forward.1} parent=0 // pred_region
    _
  $region25: #{graph_decoder_forward.1} parent=0 // pred_fallthru
    _
  // Predicated region
  $region26: #{graph_decoder_forward.1} parent=0 // pred_check
    _
  $region27: #{graph_decoder_forward.1} parent=0 // pred_check_branch
    %25 = sbr.rel (0) target = $region29
  $region28: #{graph_decoder_forward.1} parent=0 // pred_region
    _
  $region29: #{graph_decoder_forward.1} parent=0 // pred_fallthru
    _
  %v26 = vld [vmem:[%s0] sm:$0xff]
  %v27 = vld [vmem:[%s0 + $0x8] sm:$0xff]
  %v28 = vld [vmem:[%s0 + $0x10] sm:$0xff]
  %v29 = vld [vmem:[%s0 + $0x18] sm:$0xff]
  %v30 = vld [vmem:[%s1] sm:$0xff]
  %v31 = vld [vmem:[%s1 + $0x8] sm:$0xff]
  %v32 = vld [vmem:[%s1 + $0x10] sm:$0xff]
  %v33 = vld [vmem:[%s1 + $0x18] sm:$0xff]
  %vm34 = vcmask 261120
  %v36 = vsel %vm34, %v30, 0
  %v39 = vsel %vm34, %v31, 0
  %v42 = vsel %vm34, %v32, 0
  %v45 = vsel %vm34, %v33, 0
  %47 = vmatpush.msra.mxu0 0.0
  %48 = vmatpush.msra.mxu0 0.0
  %49 = vmatpush.msra.mxu0 0.0
  %50 = vmatpush.msra.mxu0 0.0
  %51 = vmatpush.msra.mxu0 0.0
  %52 = vmatpush.msra.mxu0 0.0
  %53 = vmatpush.msra.mxu0 0.0
  %54 = vmatpush.msra.mxu0 0.0
  %55 = vmatpush.msra.mxu0 0.0
  %56 = vmatpush.msra.mxu0 0.0
  %57 = vmatpush.msra.mxu0 0.0
  %58 = vmatpush.msra.mxu0 0.0
  %59 = vmatpush.msra.mxu0 %v29
  %60 = vmatpush.msra.mxu0 %v28
  %61 = vmatpush.msra.mxu0 %v27
  %62 = vmatpush.msra.mxu0 %v26
  %63 = vmatmul.f32.gmra.mxu0 %v36
  %v64 = vpop.f32.mrf.mxu0
  %v65 = vadd.f32 0.0, %v64
  %66 = vmatmul.f32.gmra.mxu0 %v39
  %v67 = vpop.f32.mrf.mxu0
  %v68 = vadd.f32 0.0, %v67
  %69 = vmatmul.f32.gmra.mxu0 %v42
  %v70 = vpop.f32.mrf.mxu0
  %v71 = vadd.f32 0.0, %v70
  %72 = vmatmul.f32.gmra.mxu0 %v45
  %v73 = vpop.f32.mrf.mxu0
  %v74 = vadd.f32 0.0, %v73
  %75 = vdwg.mxu0
  %v76 = vld [vmem:[%s2] sm:$0xff]
  %v77 = vld [vmem:[%s2 + $0x8] sm:$0xff]
  %v78 = vld [vmem:[%s3] sm:$0xff]
  %v79 = vld [vmem:[%s3 + $0x8] sm:$0xff]
  %vm80 = vcmask 130048
  %v82 = vsel %vm80, %v26, 0
  %v85 = vsel %vm80, %v27, 0
  %v88 = vsel %vm80, %v28, 0
  %v91 = vsel %vm80, %v29, 0
  %93 = vmatpush.msra.mxu0 0.0
  %94 = vmatpush.msra.mxu0 0.0
  %95 = vmatpush.msra.mxu0 0.0
  %96 = vmatpush.msra.mxu0 0.0
  %97 = vmatpush.msra.mxu0 0.0
  %98 = vmatpush.msra.mxu0 0.0
  %99 = vmatpush.msra.mxu0 0.0
  %100 = vmatpush.msra.mxu0 0.0
  %101 = vmatpush.msra.mxu0 0.0
  %102 = vmatpush.msra.mxu0 0.0
  %103 = vmatpush.msra.mxu0 0.0
  %104 = vmatpush.msra.mxu0 0.0
  %105 = vmatpush.msra.mxu0 0.0
  %106 = vmatpush.msra.mxu0 0.0
  %107 = vmatpush.msra.mxu0 %v79
  %108 = vmatpush.msra.mxu0 %v78
  %109 = vmatmul.f32.gmra.mxu0 %v82
  %v110 = vpop.f32.mrf.mxu0
  %v111 = vadd.f32 0.0, %v110
  %112 = vmatmul.f32.gmra.mxu0 %v85
  %v113 = vpop.f32.mrf.mxu0
  %v114 = vadd.f32 0.0, %v113
  %115 = vmatmul.f32.gmra.mxu0 %v88
  %v116 = vpop.f32.mrf.mxu0
  %v117 = vadd.f32 0.0, %v116
  %118 = vmatmul.f32.gmra.mxu0 %v91
  %v119 = vpop.f32.mrf.mxu0
  %v120 = vadd.f32 0.0, %v119
  %121 = vdwg.mxu0
  %v123 = vsel %vm80, %v65, 0
  %v126 = vsel %vm80, %v68, 0
  %v129 = vsel %vm80, %v71, 0
  %v132 = vsel %vm80, %v74, 0
  %134 = vmatpush.msra.mxu0 0.0
  %135 = vmatpush.msra.mxu0 0.0
  %136 = vmatpush.msra.mxu0 0.0
  %137 = vmatpush.msra.mxu0 0.0
  %138 = vmatpush.msra.mxu0 0.0
  %139 = vmatpush.msra.mxu0 0.0
  %140 = vmatpush.msra.mxu0 0.0
  %141 = vmatpush.msra.mxu0 0.0
  %142 = vmatpush.msra.mxu0 0.0
  %143 = vmatpush.msra.mxu0 0.0
  %144 = vmatpush.msra.mxu0 0.0
  %145 = vmatpush.msra.mxu0 0.0
  %146 = vmatpush.msra.mxu0 0.0
  %147 = vmatpush.msra.mxu0 0.0
  %148 = vmatpush.msra.mxu0 %v77
  %149 = vmatpush.msra.mxu0 %v76
  %150 = vmatmul.f32.gmra.mxu0 %v123
  %v151 = vpop.f32.mrf.mxu0
  %v152 = vadd.f32 %v111, %v151
  %153 = vmatmul.f32.gmra.mxu0 %v126
  %v154 = vpop.f32.mrf.mxu0
  %v155 = vadd.f32 %v114, %v154
  %156 = vmatmul.f32.gmra.mxu0 %v129
  %v157 = vpop.f32.mrf.mxu0
  %v158 = vadd.f32 %v117, %v157
  %159 = vmatmul.f32.gmra.mxu0 %v132
  %v160 = vpop.f32.mrf.mxu0
  %v161 = vadd.f32 %v120, %v160
  %162 = vdwg.mxu0
  %v163 = vld [vmem:[%s4] sm:$0x1]
  %v165 = vperm.slane %v163, 0
  %v167 = vadd.f32 %v152, %v165
  %v168 = vadd.f32 %v155, %v165
  %v169 = vadd.f32 %v158, %v165
  %v170 = vadd.f32 %v161, %v165
  %v171 = vmax.f32 %v167, 0.0
  %v172 = vmax.f32 %v168, 0.0
  %v173 = vmax.f32 %v169, 0.0
  %v174 = vmax.f32 %v170, 0.0
  %v175 = vld [vmem:[%s5] sm:$0xff]
  %v176 = vld [vmem:[%s5 + $0x8] sm:$0xff]
  %v177 = vld [vmem:[%s5 + $0x10] sm:$0xff]
  %v178 = vld [vmem:[%s5 + $0x18] sm:$0xff]
  %v179 = vld [vmem:[%s6] sm:$0x1]
  %v181 = vperm.slane %v179, 0
  %v184 = vsel %vm34, %v171, 0
  %v187 = vsel %vm34, %v172, 0
  %v190 = vsel %vm34, %v173, 0
  %v193 = vsel %vm34, %v174, 0
  %195 = vmatpush.msra.mxu0 0.0
  %196 = vmatpush.msra.mxu0 0.0
  %197 = vmatpush.msra.mxu0 0.0
  %198 = vmatpush.msra.mxu0 0.0
  %199 = vmatpush.msra.mxu0 0.0
  %200 = vmatpush.msra.mxu0 0.0
  %201 = vmatpush.msra.mxu0 0.0
  %202 = vmatpush.msra.mxu0 0.0
  %203 = vmatpush.msra.mxu0 0.0
  %204 = vmatpush.msra.mxu0 0.0
  %205 = vmatpush.msra.mxu0 0.0
  %206 = vmatpush.msra.mxu0 0.0
  %207 = vmatpush.msra.mxu0 %v178
  %208 = vmatpush.msra.mxu0 %v177
  %209 = vmatpush.msra.mxu0 %v176
  %210 = vmatpush.msra.mxu0 %v175
  %211 = vmatmul.f32.gmra.mxu0 %v184
  %v212 = vpop.f32.mrf.mxu0
  %v213 = vadd.f32 %v181, %v212
  %214 = vmatmul.f32.gmra.mxu0 %v187
  %v215 = vpop.f32.mrf.mxu0
  %v216 = vadd.f32 %v181, %v215
  %217 = vmatmul.f32.gmra.mxu0 %v190
  %v218 = vpop.f32.mrf.mxu0
  %v219 = vadd.f32 %v181, %v218
  %220 = vmatmul.f32.gmra.mxu0 %v193
  %v221 = vpop.f32.mrf.mxu0
  %v222 = vadd.f32 %v181, %v221
  %223 = vdwg.mxu0
  %224 = vst.msk [vmem:[%s7] sm:$0xff] %vm80, %v213
  %225 = vst.msk [vmem:[%s7 + $0x8] sm:$0xff] %vm80, %v216
  %226 = vst.msk [vmem:[%s7 + $0x10] sm:$0xff] %vm80, %v219
  %227 = vst.msk [vmem:[%s7 + $0x18] sm:$0xff] %vm80, %v222
  // Predicated region
  $region30: #{graph_decoder_forward.1} parent=0 // pred_check
    _
  $region31: #{graph_decoder_forward.1} parent=0 // pred_check_branch
    %229 = sbr.rel (0) target = $region33
  $region32: #{graph_decoder_forward.1} parent=0 // pred_region
    _
  $region33: #{graph_decoder_forward.1} parent=0 // pred_fallthru
    _
  // Predicated region
  $region34: #{graph_decoder_forward.1} parent=0 // pred_check
    _
  $region35: #{graph_decoder_forward.1} parent=0 // pred_check_branch
    %231 = sbr.rel (0) target = $region37
  $region36: #{graph_decoder_forward.1} parent=0 // pred_region
    _
  $region37: #{graph_decoder_forward.1} parent=0 // pred_fallthru
    _

</llo_original>
